<compile_context>
chip_gen: v5e
topology: v5e:2x2
jax: 0.10.0
libtpu: 0.0.40
codegen_flags: <defaults>
</compile_context>

<pallas_src>
import jax
import jax.numpy as jnp
from jax import lax
from jax.experimental import pallas as pl
from jax.experimental.pallas import tpu as pltpu

BN_EPS = 1e-5
OUT_DIM = 5                       # fc3 output width
_VMEM_BUDGET = 24 * 1024 * 1024   # guard == compiler cap (v7x-safe)


# ----------------------------------------------------------------------------
# Kernel: one independent batch-group per grid point
# ----------------------------------------------------------------------------
def net_kernel(x_ref, w1_ref, w2_ref, w3_ref, b3_ref, o_ref):
    """x_ref: [B, in_dim] f32; w*: bf16 MXU operands; b3: f32; o: [B, 5] f32.

    fc1/fc2 biases are omitted (cancelled exactly by the training-mode
    BatchNorm mean subtraction). BN/ReLU math stays in f32.
    """
    inv_b = 1.0 / x_ref.shape[0]  # static batch size

    def bn_relu(h):
        # One-pass batch statistics: E[h] and E[h^2] (biased variance),
        # with a clamp so cancellation can't make var slightly negative.
        s = jnp.sum(h, axis=0, keepdims=True)
        ss = jnp.sum(h * h, axis=0, keepdims=True)
        mean = s * inv_b
        var = jnp.maximum(ss * inv_b - mean * mean, 0.0)
        return jnp.maximum((h - mean) * lax.rsqrt(var + BN_EPS), 0.0)

    x = x_ref[...].astype(w1_ref.dtype)  # in-kernel f32 -> bf16 cast (VPU)

    h = jnp.dot(x, w1_ref[...], preferred_element_type=jnp.float32)
    h = bn_relu(h)

    h = jnp.dot(h.astype(w2_ref.dtype), w2_ref[...],
                preferred_element_type=jnp.float32)
    h = bn_relu(h)

    out = jnp.dot(h.astype(w3_ref.dtype), w3_ref[...],
                  preferred_element_type=jnp.float32) + b3_ref[...]
    o_ref[...] = out.astype(o_ref.dtype)


# ----------------------------------------------------------------------------
# Wrapper
# ----------------------------------------------------------------------------
def prepare_params(params, matmul_dtype=jnp.bfloat16):
    """Cast matmul operands to bf16 once; drop b1/b2 (cancelled by BN)."""
    w1, _b1, w2, _b2, w3, b3 = params
    return (w1.astype(matmul_dtype), w2.astype(matmul_dtype),
            w3.astype(matmul_dtype), b3.astype(jnp.float32))


def _forward_grouped_impl(x_flat, kparams):
    """x_flat: [G, B, in_dim] f32. Returns [G, B, 5] f32."""
    w1, w2, w3, b3 = kparams
    G, B, in_dim = x_flat.shape

    operands = (x_flat, w1, w2, w3, b3)
    # Weights resident once; x / out double-buffered across the group grid.
    resident = sum(int(o.size) * o.dtype.itemsize for o in (w1, w2, w3, b3))
    resident += 2 * (B * in_dim * 4 + B * OUT_DIM * 4)
    if resident > _VMEM_BUDGET:
        # TODO(synk): add a batch/K-tiled path (with cross-tile BN stats) for
        # problem sizes that exceed the full-residency VMEM budget.
        raise ValueError(
            f"operands need ~{resident} B of VMEM, over the "
            f"{_VMEM_BUDGET} B full-residency budget")

    grid_spec = pltpu.PrefetchScalarGridSpec(
        num_scalar_prefetch=0,
        grid=(G,),
        in_specs=[
            pl.BlockSpec((pl.Squeezed(), B, in_dim), lambda g: (g, 0, 0)),
            pl.BlockSpec(w1.shape, lambda g: (0, 0)),
            pl.BlockSpec(w2.shape, lambda g: (0, 0)),
            pl.BlockSpec(w3.shape, lambda g: (0, 0)),
            pl.BlockSpec(b3.shape, lambda g: (0, 0)),
        ],
        out_specs=pl.BlockSpec((pl.Squeezed(), B, OUT_DIM),
                               lambda g: (g, 0, 0)),
    )
    return pl.pallas_call(
        net_kernel,
        out_shape=jax.ShapeDtypeStruct((G, B, OUT_DIM), jnp.float32),
        grid_spec=grid_spec,
        compiler_params=pltpu.CompilerParams(
            dimension_semantics=("parallel",),
            vmem_limit_bytes=_VMEM_BUDGET),
    )(*operands)


@jax.jit
def net_forward(x, kparams):
    """x: [B, 3, size, size] f32 (NCHW). Returns [B, 5] f32."""
    B = x.shape[0]
    return _forward_grouped_impl(x.reshape(1, B, -1), kparams)[0]


@jax.jit
def net_forward_grouped(xg, kparams):
    """xg: [G, B, 3, size, size] f32 — G independent batches (each with its
    own BatchNorm statistics) in one pallas_call."""
    G, B = xg.shape[0], xg.shape[1]
    return _forward_grouped_impl(xg.reshape(G, B, -1), kparams)


# ----------------------------------------------------------------------------
# Init + reference
# ----------------------------------------------------------------------------
def init_params(key, size, depth, w_std, b_std):
    """Deterministic init matching torch.nn.init.normal_ on weights/biases.
    Weights are stored transposed relative to PyTorch ([in, out])."""
    in_dim = size * size * 3
    ks = jax.random.split(key, 6)
    w1 = (jax.random.normal(ks[0], (in_dim, depth)) * w_std).astype(jnp.float32)
    b1 = (jax.random.normal(ks[1], (1, depth)) * b_std).astype(jnp.float32)
    w2 = (jax.random.normal(ks[2], (depth, depth)) * w_std).astype(jnp.float32)
    b2 = (jax.random.normal(ks[3], (1, depth)) * b_std).astype(jnp.float32)
    w3 = (jax.random.normal(ks[4], (depth, 5)) * w_std).astype(jnp.float32)
    b3 = (jax.random.normal(ks[5], (1, 5)) * b_std).astype(jnp.float32)
    return (w1, b1, w2, b2, w3, b3)


def reference_forward(x, params, matmul_dtype=jnp.float32):
    """Pure-JAX reference of the PyTorch forward (includes b1/b2, two-pass BN).
    With matmul_dtype=bfloat16 it mirrors the kernel's matmul precision."""
    w1, b1, w2, b2, w3, b3 = params
    h = x.reshape(x.shape[0], -1).astype(jnp.float32)

    def bn(h):
        mean = jnp.mean(h, axis=0, keepdims=True)
        var = jnp.mean(jnp.square(h - mean), axis=0, keepdims=True)
        return (h - mean) * lax.rsqrt(var + BN_EPS)

    def dot(a, w):
        return jnp.dot(a.astype(matmul_dtype), w.astype(matmul_dtype),
                       preferred_element_type=jnp.float32)

    h = jnp.maximum(bn(dot(h, w1) + b1), 0.0)
    h = jnp.maximum(bn(dot(h, w2) + b2), 0.0)
    return dot(h, w3) + b3


# ----------------------------------------------------------------------------
# Main
# ----------------------------------------------------------------------------
if __name__ == "__main__":
    size = 16     # spatial size -> fc1 input = 16*16*3 = 768
    depth = 32    # hidden width
    w_std = 1.0
    b_std = 0.1
    batch = 8     # > 1 so BatchNorm batch statistics are well-defined
    groups = 4    # independent batches amortized in one pallas_call

    root = jax.random.PRNGKey(0)
    k_x, k_p, k_g = jax.random.split(root, 3)

    x = jax.random.normal(k_x, (batch, 3, size, size), dtype=jnp.float32)
    params = init_params(k_p, size, depth, w_std, b_std)
    kparams = prepare_params(params)

    # --- single-batch forward (the module's forward) ---
    out = jax.block_until_ready(net_forward(x, kparams))
    assert out.shape == (batch, 5)

    # Tight element-wise check against a reference with the same matmul
    # precision (bf16 operands, f32 accumulation).
    ref_bf16 = jax.block_until_ready(reference_forward(x, params, jnp.bfloat16))
    assert jnp.allclose(out, ref_bf16, atol=1e-2, rtol=1e-2), \
        "mismatch vs same-precision (bf16-operand) reference"

    # Sanity check against the full-f32 PyTorch-equivalent forward.
    ref_f32 = jax.block_until_ready(reference_forward(x, params, jnp.float32))
    rel_err = jnp.linalg.norm(out - ref_f32) / jnp.linalg.norm(ref_f32)
    assert rel_err < 1e-1, f"bf16 drift vs f32 reference too large: {rel_err}"

    # --- grouped forward: G independent batches in one pallas_call ---
    xg = jax.random.normal(k_g, (groups, batch, 3, size, size),
                           dtype=jnp.float32)
    out_g = jax.block_until_ready(net_forward_grouped(xg, kparams))
    assert out_g.shape == (groups, batch, 5)
    ref_g = jnp.stack([reference_forward(xg[g], params, jnp.bfloat16)
                       for g in range(groups)])
    assert jnp.allclose(out_g, ref_g, atol=1e-2, rtol=1e-2), \
        "grouped path mismatch vs per-group reference"

    print("KERNEL_OK")
</pallas_src>

<mosaic_0001>
module attributes {stable_mosaic.version = 11 : i64} {
  func.func @net_kernel(%arg0: i32, %arg1: memref<1x8x768xf32, #tpu.memory_space<vmem>>, %arg2: memref<768x32xbf16, #tpu.memory_space<vmem>>, %arg3: memref<32x32xbf16, #tpu.memory_space<vmem>>, %arg4: memref<32x5xbf16, #tpu.memory_space<vmem>>, %arg5: memref<1x5xf32, #tpu.memory_space<vmem>>, %arg6: memref<1x8x5xf32, #tpu.memory_space<vmem>>) attributes {dimension_semantics = [#tpu.dimension_semantics<parallel>], iteration_bounds = array<i64: 1>, scalar_prefetch = 0 : i64, scratch_operands = 0 : i64, tpu.core_type = #tpu.core_type<tc>, window_params = [{transform_indices = @transform_0, window_bounds = array<i64: 1, 8, 768>}, {pipeline_mode = #tpu.pipeline_mode<synchronous>, transform_indices = @transform_1, window_bounds = array<i64: 768, 32>}, {pipeline_mode = #tpu.pipeline_mode<synchronous>, transform_indices = @transform_2, window_bounds = array<i64: 32, 32>}, {pipeline_mode = #tpu.pipeline_mode<synchronous>, transform_indices = @transform_3, window_bounds = array<i64: 32, 5>}, {pipeline_mode = #tpu.pipeline_mode<synchronous>, transform_indices = @transform_4, window_bounds = array<i64: 1, 5>}, {transform_indices = @transform_5, window_bounds = array<i64: 1, 8, 5>}]} {
    %c0 = arith.constant 0 : index
    %c0_0 = arith.constant 0 : index
    %c0_1 = arith.constant 0 : index
    %0 = vector.load %arg1[%c0, %c0_0, %c0_1] : memref<1x8x768xf32, #tpu.memory_space<vmem>>, vector<1x8x768xf32>
    %1 = vector.shape_cast %0 : vector<1x8x768xf32> to vector<8x768xf32>
    %2 = arith.truncf %1 : vector<8x768xf32> to vector<8x768xbf16>
    %c0_2 = arith.constant 0 : index
    %c0_3 = arith.constant 0 : index
    %3 = vector.load %arg2[%c0_2, %c0_3] : memref<768x32xbf16, #tpu.memory_space<vmem>>, vector<768x32xbf16>
    %cst = arith.constant dense<0.000000e+00> : vector<8x32xf32>
    %4 = tpu.matmul %2, %3, %cst {dimension_numbers = #tpu.dot_dimension_numbers<[1], [0], [0], [1], [0, 0, 1, 1], [], []>} : vector<8x768xbf16>, vector<768x32xbf16>, vector<8x32xf32> -> vector<8x32xf32>
    %cst_4 = arith.constant dense<0.000000e+00> : vector<32xf32>
    %5 = vector.multi_reduction <add>, %4, %cst_4 [0] : vector<8x32xf32> to vector<32xf32>
    %6 = vector.shape_cast %5 : vector<32xf32> to vector<1x32xf32>
    %7 = arith.mulf %4, %4 : vector<8x32xf32>
    %cst_5 = arith.constant dense<0.000000e+00> : vector<32xf32>
    %8 = vector.multi_reduction <add>, %7, %cst_5 [0] : vector<8x32xf32> to vector<32xf32>
    %9 = vector.shape_cast %8 : vector<32xf32> to vector<1x32xf32>
    %cst_6 = arith.constant 1.250000e-01 : f32
    %10 = vector.broadcast %cst_6 : f32 to vector<1x32xf32>
    %11 = arith.mulf %6, %10 : vector<1x32xf32>
    %cst_7 = arith.constant 1.250000e-01 : f32
    %12 = vector.broadcast %cst_7 : f32 to vector<1x32xf32>
    %13 = arith.mulf %9, %12 : vector<1x32xf32>
    %14 = arith.mulf %11, %11 : vector<1x32xf32>
    %15 = arith.subf %13, %14 : vector<1x32xf32>
    %cst_8 = arith.constant 0.000000e+00 : f32
    %16 = vector.broadcast %cst_8 : f32 to vector<1x32xf32>
    %17 = arith.maximumf %15, %16 : vector<1x32xf32>
    %18 = vector.broadcast %11 : vector<1x32xf32> to vector<8x32xf32>
    %19 = arith.subf %4, %18 : vector<8x32xf32>
    %cst_9 = arith.constant 9.99999974E-6 : f32
    %20 = vector.broadcast %cst_9 : f32 to vector<1x32xf32>
    %21 = arith.addf %17, %20 : vector<1x32xf32>
    %22 = math.rsqrt %21 : vector<1x32xf32>
    %23 = vector.broadcast %22 : vector<1x32xf32> to vector<8x32xf32>
    %24 = arith.mulf %19, %23 : vector<8x32xf32>
    %cst_10 = arith.constant 0.000000e+00 : f32
    %25 = vector.broadcast %cst_10 : f32 to vector<8x32xf32>
    %26 = arith.maximumf %24, %25 : vector<8x32xf32>
    %27 = arith.truncf %26 : vector<8x32xf32> to vector<8x32xbf16>
    %c0_11 = arith.constant 0 : index
    %c0_12 = arith.constant 0 : index
    %28 = vector.load %arg3[%c0_11, %c0_12] : memref<32x32xbf16, #tpu.memory_space<vmem>>, vector<32x32xbf16>
    %cst_13 = arith.constant dense<0.000000e+00> : vector<8x32xf32>
    %29 = tpu.matmul %27, %28, %cst_13 {dimension_numbers = #tpu.dot_dimension_numbers<[1], [0], [0], [1], [0, 0, 1, 1], [], []>} : vector<8x32xbf16>, vector<32x32xbf16>, vector<8x32xf32> -> vector<8x32xf32>
    %cst_14 = arith.constant dense<0.000000e+00> : vector<32xf32>
    %30 = vector.multi_reduction <add>, %29, %cst_14 [0] : vector<8x32xf32> to vector<32xf32>
    %31 = vector.shape_cast %30 : vector<32xf32> to vector<1x32xf32>
    %32 = arith.mulf %29, %29 : vector<8x32xf32>
    %cst_15 = arith.constant dense<0.000000e+00> : vector<32xf32>
    %33 = vector.multi_reduction <add>, %32, %cst_15 [0] : vector<8x32xf32> to vector<32xf32>
    %34 = vector.shape_cast %33 : vector<32xf32> to vector<1x32xf32>
    %cst_16 = arith.constant 1.250000e-01 : f32
    %35 = vector.broadcast %cst_16 : f32 to vector<1x32xf32>
    %36 = arith.mulf %31, %35 : vector<1x32xf32>
    %cst_17 = arith.constant 1.250000e-01 : f32
    %37 = vector.broadcast %cst_17 : f32 to vector<1x32xf32>
    %38 = arith.mulf %34, %37 : vector<1x32xf32>
    %39 = arith.mulf %36, %36 : vector<1x32xf32>
    %40 = arith.subf %38, %39 : vector<1x32xf32>
    %cst_18 = arith.constant 0.000000e+00 : f32
    %41 = vector.broadcast %cst_18 : f32 to vector<1x32xf32>
    %42 = arith.maximumf %40, %41 : vector<1x32xf32>
    %43 = vector.broadcast %36 : vector<1x32xf32> to vector<8x32xf32>
    %44 = arith.subf %29, %43 : vector<8x32xf32>
    %cst_19 = arith.constant 9.99999974E-6 : f32
    %45 = vector.broadcast %cst_19 : f32 to vector<1x32xf32>
    %46 = arith.addf %42, %45 : vector<1x32xf32>
    %47 = math.rsqrt %46 : vector<1x32xf32>
    %48 = vector.broadcast %47 : vector<1x32xf32> to vector<8x32xf32>
    %49 = arith.mulf %44, %48 : vector<8x32xf32>
    %cst_20 = arith.constant 0.000000e+00 : f32
    %50 = vector.broadcast %cst_20 : f32 to vector<8x32xf32>
    %51 = arith.maximumf %49, %50 : vector<8x32xf32>
    %52 = arith.truncf %51 : vector<8x32xf32> to vector<8x32xbf16>
    %c0_21 = arith.constant 0 : index
    %c0_22 = arith.constant 0 : index
    %53 = vector.load %arg4[%c0_21, %c0_22] : memref<32x5xbf16, #tpu.memory_space<vmem>>, vector<32x5xbf16>
    %cst_23 = arith.constant dense<0.000000e+00> : vector<8x5xf32>
    %54 = tpu.matmul %52, %53, %cst_23 {dimension_numbers = #tpu.dot_dimension_numbers<[1], [0], [0], [1], [0, 0, 1, 1], [], []>} : vector<8x32xbf16>, vector<32x5xbf16>, vector<8x5xf32> -> vector<8x5xf32>
    %c0_24 = arith.constant 0 : index
    %c0_25 = arith.constant 0 : index
    %55 = vector.load %arg5[%c0_24, %c0_25] : memref<1x5xf32, #tpu.memory_space<vmem>>, vector<1x5xf32>
    %56 = vector.broadcast %55 : vector<1x5xf32> to vector<8x5xf32>
    %57 = arith.addf %54, %56 : vector<8x5xf32>
    %c0_26 = arith.constant 0 : index
    %c0_27 = arith.constant 0 : index
    %c0_28 = arith.constant 0 : index
    %58 = vector.load %arg6[%c0_26, %c0_27, %c0_28] : memref<1x8x5xf32, #tpu.memory_space<vmem>>, vector<1x8x5xf32>
    %59 = vector.shape_cast %58 : vector<1x8x5xf32> to vector<8x5xf32>
    %60 = vector.shape_cast %57 : vector<8x5xf32> to vector<1x8x5xf32>
    tpu.vector_store %arg6[%c0_26, %c0_27, %c0_28], %60 {strides = array<i32>} : memref<1x8x5xf32, #tpu.memory_space<vmem>>, vector<1x8x5xf32>,
    return
  }
  func.func @transform_0(%arg0: i32) -> (i32, i32, i32) {
    %c0_i32 = arith.constant 0 : i32
    %c0_i32_0 = arith.constant 0 : i32
    %c0_i32_1 = arith.constant 0 : i32
    return %arg0, %c0_i32, %c0_i32_0 : i32, i32, i32
  }
  func.func @transform_1(%arg0: i32) -> (i32, i32) {
    %c0_i32 = arith.constant 0 : i32
    %c0_i32_0 = arith.constant 0 : i32
    %c0_i32_1 = arith.constant 0 : i32
    return %c0_i32, %c0_i32_0 : i32, i32
  }
  func.func @transform_2(%arg0: i32) -> (i32, i32) {
    %c0_i32 = arith.constant 0 : i32
    %c0_i32_0 = arith.constant 0 : i32
    %c0_i32_1 = arith.constant 0 : i32
    return %c0_i32, %c0_i32_0 : i32, i32
  }
  func.func @transform_3(%arg0: i32) -> (i32, i32) {
    %c0_i32 = arith.constant 0 : i32
    %c0_i32_0 = arith.constant 0 : i32
    %c0_i32_1 = arith.constant 0 : i32
    return %c0_i32, %c0_i32_0 : i32, i32
  }
  func.func @transform_4(%arg0: i32) -> (i32, i32) {
    %c0_i32 = arith.constant 0 : i32
    %c0_i32_0 = arith.constant 0 : i32
    %c0_i32_1 = arith.constant 0 : i32
    return %c0_i32, %c0_i32_0 : i32, i32
  }
  func.func @transform_5(%arg0: i32) -> (i32, i32, i32) {
    %c0_i32 = arith.constant 0 : i32
    %c0_i32_0 = arith.constant 0 : i32
    %c0_i32_1 = arith.constant 0 : i32
    return %arg0, %c0_i32, %c0_i32_0 : i32, i32, i32
  }
}

</mosaic_0001>

<llo_original>
// kernel: net_forward.1
$region0: #{net_forward.1}
  #allocation0 [shape = 'u32[]', space=smem, size = 0x4, offset = 0x4, fixed_abs, tag = 'smem constant byte address 0x4 - core index']
  #allocation1 [shape = 'u32[72,128]{1,0:T(1,128)}', space=vmem, size = 0x9000, scoped, tag = 'internal scratch']
  %s0 = inlined_call_operand.vmem [shape: f32[1,8,768], index: 0, kind: input, shape index: {}]
  %s1 = inlined_call_operand.vmem [shape: bf16[768,32], index: 1, kind: input, shape index: {}]
  %s2 = inlined_call_operand.vmem [shape: bf16[32,32], index: 2, kind: input, shape index: {}]
  %s3 = inlined_call_operand.vmem [shape: bf16[32,5], index: 3, kind: input, shape index: {}]
  %s4 = inlined_call_operand.vmem [shape: f32[1,5], index: 4, kind: input, shape index: {}]
  %s5 = inlined_call_operand.hbm [shape: f32[1,8,5], index: 5, kind: output, shape index: {}]
  %s6 = sld [smem:[#allocation0]]
  $region30: #{net_forward.1} parent=0
    _
  %s8 = ssub.s32 1, %s6
  %s9 = scalar_select 0, %s8, %s6
  $region1: #{net_forward.1} parent=0
    #allocation2 [shape = 'u8[4096]{0}', space=vmem, size = 0x1000, scoped, tag = 'output window, operand 0, single buffered']
    #allocation3 [shape = 's32[1]{0}', space=sflag, size = 0x4, scoped, tag = 'scoped memory for net_forward.1']
    %10 = vsyncpa [#allocation3], 0
    // Predicated region
    $region2: #{net_forward.1} parent=1 // pred_check
      _
    $region3: #{net_forward.1} parent=1 // pred_check_branch
      %12 = sbr.rel (0) target = $region5
    $region4: #{net_forward.1} parent=1 // pred_region
      _
    $region5: #{net_forward.1} parent=1 // pred_fallthru
      _
    // Predicated region
    $region6: #{net_forward.1} parent=1 // pred_check
      _
    $region7: #{net_forward.1} parent=1 // pred_check_branch
      %14 = sbr.rel (0) target = $region9
    $region8: #{net_forward.1} parent=1 // pred_region
      _
    $region9: #{net_forward.1} parent=1 // pred_fallthru
      _
    // Predicated region
    $region10: #{net_forward.1} parent=1 // pred_check
      _
    $region11: #{net_forward.1} parent=1 // pred_check_branch
      %16 = sbr.rel (0) target = $region13
    $region12: #{net_forward.1} parent=1 // pred_region
      _
    $region13: #{net_forward.1} parent=1 // pred_fallthru
      _
    // Predicated region
    $region14: #{net_forward.1} parent=1 // pred_check
      _
    $region15: #{net_forward.1} parent=1 // pred_check_branch
      %18 = sbr.rel (0) target = $region17
    $region16: #{net_forward.1} parent=1 // pred_region
      _
    $region17: #{net_forward.1} parent=1 // pred_fallthru
      _
    // Predicated region
    $region18: #{net_forward.1} parent=1 // pred_check
      _
    $region19: #{net_forward.1} parent=1 // pred_check_branch
      %20 = sbr.rel (0) target = $region21
    $region20: #{net_forward.1} parent=1 // pred_region
      _
    $region21: #{net_forward.1} parent=1 // pred_fallthru
      _
    %v22 = vld [vmem:[%s0] sm:$0xff]
    %v23 = vld [vmem:[%s0 + $0x8] sm:$0xff]
    %v24 = vld [vmem:[%s0 + $0x10] sm:$0xff]
    %v25 = vld [vmem:[%s0 + $0x18] sm:$0xff]
    %v26 = vld [vmem:[%s0 + $0x20] sm:$0xff]
    %v27 = vld [vmem:[%s0 + $0x28] sm:$0xff]
    %v28 = vpack.c.bf16 %v22, %v22
    %v29 = vpack.c.bf16 %v23, %v23
    %v30 = vpack.c.bf16 %v24, %v24
    %v31 = vpack.c.bf16 %v25, %v25
    %v32 = vpack.c.bf16 %v26, %v26
    %v33 = vpack.c.bf16 %v27, %v27
    %v34 = vld [vmem:[%s1] sm:$0xf]
    %v35 = vld [vmem:[%s1 + $0x4] sm:$0xf]
    %v36 = vld [vmem:[%s1 + $0x8] sm:$0xf]
    %v37 = vld [vmem:[%s1 + $0xc] sm:$0xf]
    %v38 = vld [vmem:[%s1 + $0x10] sm:$0xf]
    %v39 = vld [vmem:[%s1 + $0x14] sm:$0xf]
    %v40 = vld [vmem:[%s1 + $0x18] sm:$0xf]
    %v41 = vld [vmem:[%s1 + $0x1c] sm:$0xf]
    %v42 = vld [vmem:[%s1 + $0x20] sm:$0xf]
    %v43 = vld [vmem:[%s1 + $0x24] sm:$0xf]
    %v44 = vld [vmem:[%s1 + $0x28] sm:$0xf]
    %v45 = vld [vmem:[%s1 + $0x2c] sm:$0xf]
    %v46 = vld [vmem:[%s1 + $0x30] sm:$0xf]
    %v47 = vld [vmem:[%s1 + $0x34] sm:$0xf]
    %v48 = vld [vmem:[%s1 + $0x38] sm:$0xf]
    %v49 = vld [vmem:[%s1 + $0x3c] sm:$0xf]
    %v50 = vld [vmem:[%s1 + $0x40] sm:$0xf]
    %v51 = vld [vmem:[%s1 + $0x44] sm:$0xf]
    %v52 = vld [vmem:[%s1 + $0x48] sm:$0xf]
    %v53 = vld [vmem:[%s1 + $0x4c] sm:$0xf]
    %v54 = vld [vmem:[%s1 + $0x50] sm:$0xf]
    %v55 = vld [vmem:[%s1 + $0x54] sm:$0xf]
    %v56 = vld [vmem:[%s1 + $0x58] sm:$0xf]
    %v57 = vld [vmem:[%s1 + $0x5c] sm:$0xf]
    %v58 = vld [vmem:[%s1 + $0x60] sm:$0xf]
    %v59 = vld [vmem:[%s1 + $0x64] sm:$0xf]
    %v60 = vld [vmem:[%s1 + $0x68] sm:$0xf]
    %v61 = vld [vmem:[%s1 + $0x6c] sm:$0xf]
    %v62 = vld [vmem:[%s1 + $0x70] sm:$0xf]
    %v63 = vld [vmem:[%s1 + $0x74] sm:$0xf]
    %v64 = vld [vmem:[%s1 + $0x78] sm:$0xf]
    %v65 = vld [vmem:[%s1 + $0x7c] sm:$0xf]
    %v66 = vld [vmem:[%s1 + $0x80] sm:$0xf]
    %v67 = vld [vmem:[%s1 + $0x84] sm:$0xf]
    %v68 = vld [vmem:[%s1 + $0x88] sm:$0xf]
    %v69 = vld [vmem:[%s1 + $0x8c] sm:$0xf]
    %v70 = vld [vmem:[%s1 + $0x90] sm:$0xf]
    %v71 = vld [vmem:[%s1 + $0x94] sm:$0xf]
    %v72 = vld [vmem:[%s1 + $0x98] sm:$0xf]
    %v73 = vld [vmem:[%s1 + $0x9c] sm:$0xf]
    %v74 = vld [vmem:[%s1 + $0xa0] sm:$0xf]
    %v75 = vld [vmem:[%s1 + $0xa4] sm:$0xf]
    %v76 = vld [vmem:[%s1 + $0xa8] sm:$0xf]
    %v77 = vld [vmem:[%s1 + $0xac] sm:$0xf]
    %v78 = vld [vmem:[%s1 + $0xb0] sm:$0xf]
    %v79 = vld [vmem:[%s1 + $0xb4] sm:$0xf]
    %v80 = vld [vmem:[%s1 + $0xb8] sm:$0xf]
    %v81 = vld [vmem:[%s1 + $0xbc] sm:$0xf]
    %v82 = vld [vmem:[%s1 + $0xc0] sm:$0xf]
    %v83 = vld [vmem:[%s1 + $0xc4] sm:$0xf]
    %v84 = vld [vmem:[%s1 + $0xc8] sm:$0xf]
    %v85 = vld [vmem:[%s1 + $0xcc] sm:$0xf]
    %v86 = vld [vmem:[%s1 + $0xd0] sm:$0xf]
    %v87 = vld [vmem:[%s1 + $0xd4] sm:$0xf]
    %v88 = vld [vmem:[%s1 + $0xd8] sm:$0xf]
    %v89 = vld [vmem:[%s1 + $0xdc] sm:$0xf]
    %v90 = vld [vmem:[%s1 + $0xe0] sm:$0xf]
    %v91 = vld [vmem:[%s1 + $0xe4] sm:$0xf]
    %v92 = vld [vmem:[%s1 + $0xe8] sm:$0xf]
    %v93 = vld [vmem:[%s1 + $0xec] sm:$0xf]
    %v94 = vld [vmem:[%s1 + $0xf0] sm:$0xf]
    %v95 = vld [vmem:[%s1 + $0xf4] sm:$0xf]
    %v96 = vld [vmem:[%s1 + $0xf8] sm:$0xf]
    %v97 = vld [vmem:[%s1 + $0xfc] sm:$0xf]
    %v98 = vld [vmem:[%s1 + $0x100] sm:$0xf]
    %v99 = vld [vmem:[%s1 + $0x104] sm:$0xf]
    %v100 = vld [vmem:[%s1 + $0x108] sm:$0xf]
    %v101 = vld [vmem:[%s1 + $0x10c] sm:$0xf]
    %v102 = vld [vmem:[%s1 + $0x110] sm:$0xf]
    %v103 = vld [vmem:[%s1 + $0x114] sm:$0xf]
    %v104 = vld [vmem:[%s1 + $0x118] sm:$0xf]
    %v105 = vld [vmem:[%s1 + $0x11c] sm:$0xf]
    %v106 = vld [vmem:[%s1 + $0x120] sm:$0xf]
    %v107 = vld [vmem:[%s1 + $0x124] sm:$0xf]
    %v108 = vld [vmem:[%s1 + $0x128] sm:$0xf]
    %v109 = vld [vmem:[%s1 + $0x12c] sm:$0xf]
    %v110 = vld [vmem:[%s1 + $0x130] sm:$0xf]
    %v111 = vld [vmem:[%s1 + $0x134] sm:$0xf]
    %v112 = vld [vmem:[%s1 + $0x138] sm:$0xf]
    %v113 = vld [vmem:[%s1 + $0x13c] sm:$0xf]
    %v114 = vld [vmem:[%s1 + $0x140] sm:$0xf]
    %v115 = vld [vmem:[%s1 + $0x144] sm:$0xf]
    %v116 = vld [vmem:[%s1 + $0x148] sm:$0xf]
    %v117 = vld [vmem:[%s1 + $0x14c] sm:$0xf]
    %v118 = vld [vmem:[%s1 + $0x150] sm:$0xf]
    %v119 = vld [vmem:[%s1 + $0x154] sm:$0xf]
    %v120 = vld [vmem:[%s1 + $0x158] sm:$0xf]
    %v121 = vld [vmem:[%s1 + $0x15c] sm:$0xf]
    %v122 = vld [vmem:[%s1 + $0x160] sm:$0xf]
    %v123 = vld [vmem:[%s1 + $0x164] sm:$0xf]
    %v124 = vld [vmem:[%s1 + $0x168] sm:$0xf]
    %v125 = vld [vmem:[%s1 + $0x16c] sm:$0xf]
    %v126 = vld [vmem:[%s1 + $0x170] sm:$0xf]
    %v127 = vld [vmem:[%s1 + $0x174] sm:$0xf]
    %v128 = vld [vmem:[%s1 + $0x178] sm:$0xf]
    %v129 = vld [vmem:[%s1 + $0x17c] sm:$0xf]
    %v226 = vunpack.c.l.b16 %v34
    %v227 = vunpack.c.l.b16 %v35
    %v228 = vunpack.c.l.b16 %v36
    %v229 = vunpack.c.l.b16 %v37
    %v230 = vunpack.c.l.b16 %v38
    %v231 = vunpack.c.l.b16 %v39
    %v232 = vunpack.c.l.b16 %v40
    %v233 = vunpack.c.l.b16 %v41
    %v234 = vunpack.c.l.b16 %v42
    %v235 = vunpack.c.l.b16 %v43
    %v236 = vunpack.c.l.b16 %v44
    %v237 = vunpack.c.l.b16 %v45
    %v238 = vunpack.c.l.b16 %v46
    %v239 = vunpack.c.l.b16 %v47
    %v240 = vunpack.c.l.b16 %v48
    %v241 = vunpack.c.l.b16 %v49
    %v242 = vunpack.c.l.b16 %v50
    %v243 = vunpack.c.l.b16 %v51
    %v244 = vunpack.c.l.b16 %v52
    %v245 = vunpack.c.l.b16 %v53
    %v246 = vunpack.c.l.b16 %v54
    %v247 = vunpack.c.l.b16 %v55
    %v248 = vunpack.c.l.b16 %v56
    %v249 = vunpack.c.l.b16 %v57
    %v250 = vunpack.c.l.b16 %v58
    %v251 = vunpack.c.l.b16 %v59
    %v252 = vunpack.c.l.b16 %v60
    %v253 = vunpack.c.l.b16 %v61
    %v254 = vunpack.c.l.b16 %v62
    %v255 = vunpack.c.l.b16 %v63
    %v256 = vunpack.c.l.b16 %v64
    %v257 = vunpack.c.l.b16 %v65
    %v258 = vunpack.c.l.b16 %v66
    %v259 = vunpack.c.l.b16 %v67
    %v260 = vunpack.c.l.b16 %v68
    %v261 = vunpack.c.l.b16 %v69
    %v262 = vunpack.c.l.b16 %v70
    %v263 = vunpack.c.l.b16 %v71
    %v264 = vunpack.c.l.b16 %v72
    %v265 = vunpack.c.l.b16 %v73
    %v266 = vunpack.c.l.b16 %v74
    %v267 = vunpack.c.l.b16 %v75
    %v268 = vunpack.c.l.b16 %v76
    %v269 = vunpack.c.l.b16 %v77
    %v270 = vunpack.c.l.b16 %v78
    %v271 = vunpack.c.l.b16 %v79
    %v272 = vunpack.c.l.b16 %v80
    %v273 = vunpack.c.l.b16 %v81
    %v274 = vunpack.c.l.b16 %v82
    %v275 = vunpack.c.l.b16 %v83
    %v276 = vunpack.c.l.b16 %v84
    %v277 = vunpack.c.l.b16 %v85
    %v278 = vunpack.c.l.b16 %v86
    %v279 = vunpack.c.l.b16 %v87
    %v280 = vunpack.c.l.b16 %v88
    %v281 = vunpack.c.l.b16 %v89
    %v282 = vunpack.c.l.b16 %v90
    %v283 = vunpack.c.l.b16 %v91
    %v284 = vunpack.c.l.b16 %v92
    %v285 = vunpack.c.l.b16 %v93
    %v286 = vunpack.c.l.b16 %v94
    %v287 = vunpack.c.l.b16 %v95
    %v288 = vunpack.c.l.b16 %v96
    %v289 = vunpack.c.l.b16 %v97
    %v290 = vunpack.c.l.b16 %v98
    %v291 = vunpack.c.l.b16 %v99
    %v292 = vunpack.c.l.b16 %v100
    %v293 = vunpack.c.l.b16 %v101
    %v294 = vunpack.c.l.b16 %v102
    %v295 = vunpack.c.l.b16 %v103
    %v296 = vunpack.c.l.b16 %v104
    %v297 = vunpack.c.l.b16 %v105
    %v298 = vunpack.c.l.b16 %v106
    %v299 = vunpack.c.l.b16 %v107
    %v300 = vunpack.c.l.b16 %v108
    %v301 = vunpack.c.l.b16 %v109
    %v302 = vunpack.c.l.b16 %v110
    %v303 = vunpack.c.l.b16 %v111
    %v304 = vunpack.c.l.b16 %v112
    %v305 = vunpack.c.l.b16 %v113
    %v306 = vunpack.c.l.b16 %v114
    %v307 = vunpack.c.l.b16 %v115
    %v308 = vunpack.c.l.b16 %v116
    %v309 = vunpack.c.l.b16 %v117
    %v310 = vunpack.c.l.b16 %v118
    %v311 = vunpack.c.l.b16 %v119
    %v312 = vunpack.c.l.b16 %v120
    %v313 = vunpack.c.l.b16 %v121
    %v314 = vunpack.c.l.b16 %v122
    %v315 = vunpack.c.l.b16 %v123
    %v316 = vunpack.c.l.b16 %v124
    %v317 = vunpack.c.l.b16 %v125
    %v318 = vunpack.c.l.b16 %v126
    %v319 = vunpack.c.l.b16 %v127
    %v320 = vunpack.c.l.b16 %v128
    %v321 = vunpack.c.l.b16 %v129
    %v322 = vpack.c.b16 %v227, %v226
    %v323 = vpack.c.b16 %v229, %v228
    %v324 = vpack.c.b16 %v231, %v230
    %v325 = vpack.c.b16 %v233, %v232
    %v326 = vpack.c.b16 %v235, %v234
    %v327 = vpack.c.b16 %v237, %v236
    %v328 = vpack.c.b16 %v239, %v238
    %v329 = vpack.c.b16 %v241, %v240
    %v330 = vpack.c.b16 %v243, %v242
    %v331 = vpack.c.b16 %v245, %v244
    %v332 = vpack.c.b16 %v247, %v246
    %v333 = vpack.c.b16 %v249, %v248
    %v334 = vpack.c.b16 %v251, %v250
    %v335 = vpack.c.b16 %v253, %v252
    %v336 = vpack.c.b16 %v255, %v254
    %v337 = vpack.c.b16 %v257, %v256
    %v338 = vpack.c.b16 %v259, %v258
    %v339 = vpack.c.b16 %v261, %v260
    %v340 = vpack.c.b16 %v263, %v262
    %v341 = vpack.c.b16 %v265, %v264
    %v342 = vpack.c.b16 %v267, %v266
    %v343 = vpack.c.b16 %v269, %v268
    %v344 = vpack.c.b16 %v271, %v270
    %v345 = vpack.c.b16 %v273, %v272
    %v346 = vpack.c.b16 %v275, %v274
    %v347 = vpack.c.b16 %v277, %v276
    %v348 = vpack.c.b16 %v279, %v278
    %v349 = vpack.c.b16 %v281, %v280
    %v350 = vpack.c.b16 %v283, %v282
    %v351 = vpack.c.b16 %v285, %v284
    %v352 = vpack.c.b16 %v287, %v286
    %v353 = vpack.c.b16 %v289, %v288
    %v354 = vpack.c.b16 %v291, %v290
    %v355 = vpack.c.b16 %v293, %v292
    %v356 = vpack.c.b16 %v295, %v294
    %v357 = vpack.c.b16 %v297, %v296
    %v358 = vpack.c.b16 %v299, %v298
    %v359 = vpack.c.b16 %v301, %v300
    %v360 = vpack.c.b16 %v303, %v302
    %v361 = vpack.c.b16 %v305, %v304
    %v362 = vpack.c.b16 %v307, %v306
    %v363 = vpack.c.b16 %v309, %v308
    %v364 = vpack.c.b16 %v311, %v310
    %v365 = vpack.c.b16 %v313, %v312
    %v366 = vpack.c.b16 %v315, %v314
    %v367 = vpack.c.b16 %v317, %v316
    %v368 = vpack.c.b16 %v319, %v318
    %v369 = vpack.c.b16 %v321, %v320
    %418 = vmatpush.bf16.msra.mxu0 %v329
    %419 = vmatpush.bf16.msra.mxu0 %v328
    %420 = vmatpush.bf16.msra.mxu0 %v327
    %421 = vmatpush.bf16.msra.mxu0 %v326
    %422 = vmatpush.bf16.msra.mxu0 %v325
    %423 = vmatpush.bf16.msra.mxu0 %v324
    %424 = vmatpush.bf16.msra.mxu0 %v323
    %425 = vmatpush.bf16.msra.mxu0 %v322
    %426 = vmatmul.bf16.gmra.mxu0 %v28
    %v427 = vpop.f32.mrf.mxu0
    %v428 = vadd.f32 0.0, %v427
    %v429 = vpop.f32.mrf.mxu0
    %430 = vdwg.mxu0
    %431 = vmatpush.bf16.msra.mxu0 %v337
    %432 = vmatpush.bf16.msra.mxu0 %v336
    %433 = vmatpush.bf16.msra.mxu0 %v335
    %434 = vmatpush.bf16.msra.mxu0 %v334
    %435 = vmatpush.bf16.msra.mxu0 %v333
    %436 = vmatpush.bf16.msra.mxu0 %v332
    %437 = vmatpush.bf16.msra.mxu0 %v331
    %438 = vmatpush.bf16.msra.mxu0 %v330
    %439 = vmatmul.bf16.gmra.mxu0 %v29
    %v440 = vpop.f32.mrf.mxu0
    %v441 = vadd.f32 %v428, %v440
    %v442 = vpop.f32.mrf.mxu0
    %443 = vdwg.mxu0
    %444 = vmatpush.bf16.msra.mxu0 %v345
    %445 = vmatpush.bf16.msra.mxu0 %v344
    %446 = vmatpush.bf16.msra.mxu0 %v343
    %447 = vmatpush.bf16.msra.mxu0 %v342
    %448 = vmatpush.bf16.msra.mxu0 %v341
    %449 = vmatpush.bf16.msra.mxu0 %v340
    %450 = vmatpush.bf16.msra.mxu0 %v339
    %451 = vmatpush.bf16.msra.mxu0 %v338
    %452 = vmatmul.bf16.gmra.mxu0 %v30
    %v453 = vpop.f32.mrf.mxu0
    %v454 = vadd.f32 %v441, %v453
    %v455 = vpop.f32.mrf.mxu0
    %456 = vdwg.mxu0
    %457 = vmatpush.bf16.msra.mxu0 %v353
    %458 = vmatpush.bf16.msra.mxu0 %v352
    %459 = vmatpush.bf16.msra.mxu0 %v351
    %460 = vmatpush.bf16.msra.mxu0 %v350
    %461 = vmatpush.bf16.msra.mxu0 %v349
    %462 = vmatpush.bf16.msra.mxu0 %v348
    %463 = vmatpush.bf16.msra.mxu0 %v347
    %464 = vmatpush.bf16.msra.mxu0 %v346
    %465 = vmatmul.bf16.gmra.mxu0 %v31
    %v466 = vpop.f32.mrf.mxu0
    %v467 = vadd.f32 %v454, %v466
    %v468 = vpop.f32.mrf.mxu0
    %469 = vdwg.mxu0
    %470 = vmatpush.bf16.msra.mxu0 %v361
    %471 = vmatpush.bf16.msra.mxu0 %v360
    %472 = vmatpush.bf16.msra.mxu0 %v359
    %473 = vmatpush.bf16.msra.mxu0 %v358
    %474 = vmatpush.bf16.msra.mxu0 %v357
    %475 = vmatpush.bf16.msra.mxu0 %v356
    %476 = vmatpush.bf16.msra.mxu0 %v355
    %477 = vmatpush.bf16.msra.mxu0 %v354
    %478 = vmatmul.bf16.gmra.mxu0 %v32
    %v479 = vpop.f32.mrf.mxu0
    %v480 = vadd.f32 %v467, %v479
    %v481 = vpop.f32.mrf.mxu0
    %482 = vdwg.mxu0
    %483 = vmatpush.bf16.msra.mxu0 %v369
    %484 = vmatpush.bf16.msra.mxu0 %v368
    %485 = vmatpush.bf16.msra.mxu0 %v367
    %486 = vmatpush.bf16.msra.mxu0 %v366
    %487 = vmatpush.bf16.msra.mxu0 %v365
    %488 = vmatpush.bf16.msra.mxu0 %v364
    %489 = vmatpush.bf16.msra.mxu0 %v363
    %490 = vmatpush.bf16.msra.mxu0 %v362
    %491 = vmatmul.bf16.gmra.mxu0 %v33
    %v492 = vpop.f32.mrf.mxu0
    %v493 = vadd.f32 %v480, %v492
    %v494 = vpop.f32.mrf.mxu0
    %495 = vdwg.mxu0
    %vm496 = vcmask 261120
    %v497 = vsel %vm496, %v493, 0.0
    %v498 = vrot.slane %v497, 4
    %v499 = vadd.f32 %v497, %v498
    %v500 = vrot.slane %v499, 2
    %v501 = vadd.f32 %v499, %v500
    %v502 = vrot.slane %v501, 1
    %v503 = vadd.f32 %v501, %v502
    %v504 = vmul.f32 %v493, %v493
    %v505 = vsel %vm496, %v504, 0.0
    %v506 = vrot.slane %v505, 4
    %v507 = vadd.f32 %v505, %v506
    %v508 = vrot.slane %v507, 2
    %v509 = vadd.f32 %v507, %v508
    %v510 = vrot.slane %v509, 1
    %v511 = vadd.f32 %v509, %v510
    %v512 = vmul.f32 %v503, 0.125
    %v513 = vmul.f32 %v511, 0.125
    %v514 = vmul.f32 %v512, %v512
    %v515 = vsub.f32 %v513, %v514
    %v516 = vmax.f32 %v515, 0.0
    %v517 = vsub.f32 %v493, %v512
    %v518 = vadd.f32 %v516, 1e-05
    %v519 = vrsqrt.pop %v518
    %v520 = vmul.f32 %v519, %v518
    %v521 = vmul.f32 %v520, %v519
    %v522 = vmul.f32 0.5, %v521
    %v523 = vsub.f32 1.5, %v522
    %v524 = vmul.f32 %v519, %v523
    %vm525 = vweird.f32 %v518
    %vm526 = vweird.f32 %v519
    %vm527 = vmor %vm525, %vm526
    %v528 = vsel %vm527, %v519, %v524
    %v529 = vmul.f32 %v517, %v528
    %v530 = vmax.f32 %v529, 0.0
    %v531 = vpack.c.bf16 %v530, %v530
    %v532 = vld [vmem:[%s2] sm:$0xf]
    %v533 = vld [vmem:[%s2 + $0x4] sm:$0xf]
    %v534 = vld [vmem:[%s2 + $0x8] sm:$0xf]
    %v535 = vld [vmem:[%s2 + $0xc] sm:$0xf]
    %v540 = vunpack.c.l.b16 %v532
    %v541 = vunpack.c.l.b16 %v533
    %v542 = vunpack.c.l.b16 %v534
    %v543 = vunpack.c.l.b16 %v535
    %v544 = vpack.c.b16 %v541, %v540
    %v545 = vpack.c.b16 %v543, %v542
    %v549 = vsel %vm496, %v531, 0
    %551 = vmatpush.bf16.msra.mxu0 0
    %552 = vmatpush.bf16.msra.mxu0 0
    %553 = vmatpush.bf16.msra.mxu0 0
    %554 = vmatpush.bf16.msra.mxu0 0
    %555 = vmatpush.bf16.msra.mxu0 0
    %556 = vmatpush.bf16.msra.mxu0 0
    %557 = vmatpush.bf16.msra.mxu0 %v545
    %558 = vmatpush.bf16.msra.mxu0 %v544
    %559 = vmatmul.bf16.gmra.mxu0 %v549
    %v560 = vpop.f32.mrf.mxu0
    %v561 = vadd.f32 0.0, %v560
    %v562 = vpop.f32.mrf.mxu0
    %563 = vdwg.mxu0
    %v564 = vsel %vm496, %v561, 0.0
    %v565 = vrot.slane %v564, 4
    %v566 = vadd.f32 %v564, %v565
    %v567 = vrot.slane %v566, 2
    %v568 = vadd.f32 %v566, %v567
    %v569 = vrot.slane %v568, 1
    %v570 = vadd.f32 %v568, %v569
    %v571 = vmul.f32 %v561, %v561
    %v572 = vsel %vm496, %v571, 0.0
    %v573 = vrot.slane %v572, 4
    %v574 = vadd.f32 %v572, %v573
    %v575 = vrot.slane %v574, 2
    %v576 = vadd.f32 %v574, %v575
    %v577 = vrot.slane %v576, 1
    %v578 = vadd.f32 %v576, %v577
    %v579 = vmul.f32 %v570, 0.125
    %v580 = vmul.f32 %v578, 0.125
    %v581 = vmul.f32 %v579, %v579
    %v582 = vsub.f32 %v580, %v581
    %v583 = vmax.f32 %v582, 0.0
    %v584 = vsub.f32 %v561, %v579
    %v585 = vadd.f32 %v583, 1e-05
    %v586 = vrsqrt.pop %v585
    %v587 = vmul.f32 %v586, %v585
    %v588 = vmul.f32 %v587, %v586
    %v589 = vmul.f32 0.5, %v588
    %v590 = vsub.f32 1.5, %v589
    %v591 = vmul.f32 %v586, %v590
    %vm592 = vweird.f32 %v585
    %vm593 = vweird.f32 %v586
    %vm594 = vmor %vm592, %vm593
    %v595 = vsel %vm594, %v586, %v591
    %v596 = vmul.f32 %v584, %v595
    %v597 = vmax.f32 %v596, 0.0
    %v598 = vpack.c.bf16 %v597, %v597
    %v599 = vld [vmem:[%s3] sm:$0xf]
    %v600 = vld [vmem:[%s3 + $0x4] sm:$0xf]
    %v601 = vld [vmem:[%s3 + $0x8] sm:$0xf]
    %v602 = vld [vmem:[%s3 + $0xc] sm:$0xf]
    %v603 = vld [vmem:[%s4] sm:$0x1]
    %v605 = vperm.slane %v603, 0
    %v611 = vunpack.c.l.b16 %v599
    %v612 = vunpack.c.l.b16 %v600
    %v613 = vunpack.c.l.b16 %v601
    %v614 = vunpack.c.l.b16 %v602
    %v615 = vpack.c.b16 %v612, %v611
    %v616 = vpack.c.b16 %v614, %v613
    %v620 = vsel %vm496, %v598, 0
    %622 = vmatpush.bf16.msra.mxu0 0
    %623 = vmatpush.bf16.msra.mxu0 0
    %624 = vmatpush.bf16.msra.mxu0 0
    %625 = vmatpush.bf16.msra.mxu0 0
    %626 = vmatpush.bf16.msra.mxu0 0
    %627 = vmatpush.bf16.msra.mxu0 0
    %628 = vmatpush.bf16.msra.mxu0 %v616
    %629 = vmatpush.bf16.msra.mxu0 %v615
    %630 = vmatmul.bf16.gmra.mxu0 %v620
    %v631 = vpop.f32.mrf.mxu0
    %v632 = vadd.f32 %v605, %v631
    %v633 = vpop.f32.mrf.mxu0
    %634 = vdwg.mxu0
    %vm635 = vcmask 39936
    %636 = vst.msk [vmem:[#allocation2] sm:$0xff] %vm635, %v632
    // Predicated region
    $region22: #{net_forward.1} parent=1 // pred_check
      _
    $region23: #{net_forward.1} parent=1 // pred_check_branch
      %638 = sbr.rel (0) target = $region25
    $region24: #{net_forward.1} parent=1 // pred_region
      %640 = vsyncadd [#allocation3], 0
      %s642 = sshll.u32 [#allocation2], 4
      %s643 = int_to_ptr.vmem [resolvable:$true] %s642
      %s644 = sshll.u32 %s5, 4
      %s645 = int_to_ptr.hbm [resolvable:$true] %s644
      %647 = dma.vmem_to_hbm [thread:$0]  %s643, 128, %s645, [#allocation3]
    $region25: #{net_forward.1} parent=1 // pred_fallthru
      _
    // Predicated region
    $region26: #{net_forward.1} parent=1 // pred_check
      _
    $region27: #{net_forward.1} parent=1 // pred_check_branch
      %649 = sbr.rel (0) target = $region29
    $region28: #{net_forward.1} parent=1 // pred_region
      %651 = dma.done [#allocation3], 128
    $region29: #{net_forward.1} parent=1 // pred_fallthru
      _
    %652 = vsyncpa [#allocation3], 1

</llo_original>
